<compile_context>
chip_gen: v7x
topology: tpu7x:2x2x1
jax: 0.10.0
libtpu: 0.0.40
codegen_flags: <defaults>
</compile_context>

<pallas_src>
import functools

import jax
import jax.numpy as jnp
from jax import lax
from jax.experimental import pallas as pl
from jax.experimental.pallas import tpu as pltpu


def _round_up(x, m):
    return ((x + m - 1) // m) * m


def _vmem_budget_bytes():
    """Per-core VMEM byte budget for tile sizing / vmem_limit_bytes.

    ~half of physical VMEM so double-buffered inputs + compiler temporaries fit:
    32 MiB on v7x (64 MiB phys), 64 MiB on v5e/v6e (128 MiB phys).
    """
    try:
        phys = int(pltpu.get_tpu_info().vmem_capacity_bytes)
    except Exception:
        phys = 64 * 1024 * 1024                      # conservative: v7x per-TC
    return min(phys // 2, 96 * 1024 * 1024)


def _pick_tile_b(B, C, in_itemsize, budget_bytes):
    """Largest sublane-aligned batch tile fitting the VMEM budget.

    Accounting: 2x double-buffered (tile_b, C) input block, ~4 live f32
    (tile_b, C) working copies (z/e/p/pw), a double-buffered (1, C, C) f32
    cov accumulator block, plus slack.
    """
    fixed = 2 * C * C * 4 + (2 << 20)
    per_row = C * (2 * in_itemsize + 4 * 4)
    avail = budget_bytes - fixed
    tile = avail // per_row if avail > 0 else 8
    tile = min(tile, 8192, _round_up(B, 8))
    return max(8, (tile // 8) * 8)


def _mcc_partial_kernel(x_ref, cov_ref, wsum_ref, *, batch, steps, tile_b,
                        temperature, eps, mm_dtype, masked):
    i = pl.program_id(1)                             # reduction-axis index

    @pl.when(i == 0)
    def _():
        cov_ref[...] = jnp.zeros_like(cov_ref)
        wsum_ref[...] = jnp.zeros_like(wsum_ref)

    x = x_ref[...].astype(jnp.float32)               # (tile_b, C), class dim on lanes

    # Temperature-scaled softmax over the class (lane) axis.
    z = x * (1.0 / temperature)
    z = z - jnp.max(z, axis=1, keepdims=True)
    e = jnp.exp(z)
    p = e * pl.reciprocal(jnp.sum(e, axis=1, keepdims=True))   # exact reciprocal

    # EntropyLoss(reduction='none') -> per-row entropy weight.
    h = -jnp.sum(p * jnp.log(p + eps), axis=1, keepdims=True)  # (tile_b, 1)
    w = 1.0 + jnp.exp(-h)                                      # (tile_b, 1)

    if masked:  # statically compiled out when the batch divides the tiling
        row0 = (pl.program_id(0) * steps + i) * tile_b
        rows = row0 + lax.broadcasted_iota(jnp.int32, (tile_b, 1), 0)
        w = jnp.where(rows < batch, w, 0.0)

    # Scalar weight-sum accumulator (replaces the old (tile_b,1) buffer).
    wsum_ref[...] += jnp.sum(w).reshape(1, 1, 1)

    # Un-normalized weighted confusion matrix: (C, C) += (p*w)^T @ p.
    # bf16 MXU inputs for large C (f32 accumulation via preferred_element_type).
    pw = (p * w).astype(mm_dtype)
    pr = p.astype(mm_dtype)
    cov_ref[...] += lax.dot_general(
        pw, pr, (((0,), (0,)), ((), ())),
        preferred_element_type=jnp.float32)[None, :, :]


def _mcc_epilogue_kernel(cov_ref, wsum_ref, o_ref, *, batch, num_classes, coeff):
    cov = jnp.sum(cov_ref[...], axis=0)              # fold per-core partials -> (C, C)
    sum_w = jnp.sum(wsum_ref[...])
    cov = cov * (float(batch) / sum_w)               # weight normalization: w <- B*w/sum(w)

    # torch: cov / cov.sum(dim=1) — the (C,) row-sum vector broadcasts over the
    # LAST dim, so column j is divided by sum_k cov[j, k].  Computed as a
    # transposed-RHS matvec so no explicit transpose is materialized.
    ones_row = jnp.ones((1, num_classes), jnp.float32)
    denom = lax.dot_general(ones_row, cov, (((1,), (1,)), ((), ())),
                            preferred_element_type=jnp.float32)     # (1, C)
    cov_n = cov * pl.reciprocal(denom)               # exact reciprocal (runs once)

    r = lax.broadcasted_iota(jnp.int32, (num_classes, num_classes), 0)
    c = lax.broadcasted_iota(jnp.int32, (num_classes, num_classes), 1)
    mcc = (coeff / float(num_classes)) * jnp.sum(jnp.where(r == c, 0.0, cov_n))
    o_ref[...] = mcc.reshape(1, 1)


@functools.partial(jax.jit,
                   static_argnames=("temperature", "coeff", "eps", "tile_b", "matmul_dtype"))
def mcc_loss(x, *, temperature=2.5, coeff=1.0, eps=1e-5, tile_b=None,
             matmul_dtype=None):
    """coeff * MCC loss for a (B, C) logit matrix (matches the PyTorch module).

    bf16 logits may be passed directly (no wrapper-side upcast); the kernel
    casts per-tile to f32 internally.
    """
    B, C = x.shape
    budget = _vmem_budget_bytes()

    if tile_b is None:
        tile_b = _pick_tile_b(B, C, jnp.dtype(x.dtype).itemsize, budget)
    else:
        tile_b = max(8, (min(int(tile_b), _round_up(B, 8)) // 8) * 8)

    num_tiles = -(-B // tile_b)
    # v7x has 2 TensorCores: shard batch tiles across a leading "parallel" axis
    # (each core builds its own (C,C) partial).  On 1-TC chips (v5e/v6e) the
    # split is a cheap sequential fold handled by the epilogue.
    num_partials = 2 if num_tiles >= 2 else 1
    steps = -(-num_tiles // num_partials)
    b_pad = num_partials * steps * tile_b
    masked = b_pad != B
    if masked:
        x = jnp.pad(x, ((0, b_pad - B), (0, 0)))     # padded rows masked in-kernel

    if matmul_dtype is None:
        matmul_dtype = jnp.bfloat16 if C >= 256 else jnp.float32

    idx_in = lambda p, i: (p * steps + i, 0)
    if tile_b <= 256 and steps >= 4:
        # Large-C regime forces a small block: deepen input pipelining to hide DMA.
        in_spec = pl.BlockSpec((tile_b, C), idx_in, pipeline_mode=pl.Buffered(3))
    else:
        in_spec = pl.BlockSpec((tile_b, C), idx_in)

    kernel = functools.partial(
        _mcc_partial_kernel, batch=B, steps=steps, tile_b=tile_b,
        temperature=float(temperature), eps=float(eps),
        mm_dtype=matmul_dtype, masked=masked)

    cov_parts, wsum_parts = pl.pallas_call(
        kernel,
        out_shape=(jax.ShapeDtypeStruct((num_partials, C, C), jnp.float32),
                   jax.ShapeDtypeStruct((num_partials, 1, 1), jnp.float32)),
        grid_spec=pltpu.PrefetchScalarGridSpec(
            num_scalar_prefetch=0,
            grid=(num_partials, steps),
            in_specs=[in_spec],
            out_specs=[pl.BlockSpec((1, C, C), lambda p, i: (p, 0, 0)),
                       pl.BlockSpec((1, 1, 1), lambda p, i: (p, 0, 0))],
        ),
        compiler_params=pltpu.CompilerParams(
            dimension_semantics=("parallel", "arbitrary"),
            vmem_limit_bytes=int(budget)),
    )(x)

    epilogue = functools.partial(
        _mcc_epilogue_kernel, batch=B, num_classes=C, coeff=float(coeff))
    out = pl.pallas_call(
        epilogue,
        out_shape=jax.ShapeDtypeStruct((1, 1), jnp.float32),
        compiler_params=pltpu.CompilerParams(vmem_limit_bytes=int(budget)),
    )(cov_parts, wsum_parts)
    return out[0, 0]


def mcc_loss_ref(x, temperature=2.5, coeff=1.0, eps=1e-5):
    """Pure-JAX mirror of the PyTorch MCCLoss.forward."""
    B, C = x.shape
    p = jax.nn.softmax(x.astype(jnp.float32) / temperature, axis=1)
    h = jnp.sum(-p * jnp.log(p + eps), axis=1)
    w = 1.0 + jnp.exp(-h)
    w = B * w / jnp.sum(w)
    cov = jnp.matmul((p * w[:, None]).T, p)
    cov = cov / jnp.sum(cov, axis=1)                 # broadcasts over last dim (torch semantics)
    return coeff * (jnp.sum(cov) - jnp.trace(cov)) / C


if __name__ == "__main__":
    key = jax.random.PRNGKey(0)
    k1, k2, k3 = jax.random.split(key, 3)

    # 1) small Office-style head: single tile, f32 MXU path.
    x1 = jax.random.normal(k1, (64, 32), dtype=jnp.float32)
    o1 = jax.block_until_ready(mcc_loss(x1, temperature=2.5, coeff=1.0))
    r1 = mcc_loss_ref(x1, temperature=2.5, coeff=1.0)
    assert jnp.allclose(o1, r1, rtol=1e-4, atol=1e-5), (o1, r1)

    # 2) ragged batch / odd class count: exercises the padded-row mask.
    x2 = jax.random.normal(k2, (50, 31), dtype=jnp.float32)
    o2 = jax.block_until_ready(mcc_loss(x2, temperature=2.5, coeff=1.0))
    r2 = mcc_loss_ref(x2, temperature=2.5, coeff=1.0)
    assert jnp.allclose(o2, r2, rtol=1e-4, atol=1e-5), (o2, r2)

    # 3) larger class count with a forced small tile: exercises the 2-partial
    #    "parallel" split, multi-step reduction, padding, and the bf16 MXU path.
    x3 = jax.random.normal(k3, (250, 384), dtype=jnp.float32)
    o3 = jax.block_until_ready(mcc_loss(x3, temperature=2.5, coeff=1.0, tile_b=64))
    r3 = mcc_loss_ref(x3, temperature=2.5, coeff=1.0)
    assert jnp.allclose(o3, r3, rtol=5e-3, atol=5e-4), (o3, r3)

    print("KERNEL_OK")
</pallas_src>

<mosaic_0001>
module attributes {stable_mosaic.version = 11 : i64} {
  func.func @_mcc_epilogue_kernel(%arg0: memref<1x32x32xf32, #tpu.memory_space<vmem>>, %arg1: memref<1x1x1xf32, #tpu.memory_space<vmem>>, %arg2: memref<1x1xf32, #tpu.memory_space<vmem>>) attributes {dimension_semantics = [], scalar_prefetch = 0 : i64, scratch_operands = 0 : i64, tpu.core_type = #tpu.core_type<tc>} {
    %c0 = arith.constant 0 : index
    %c0_0 = arith.constant 0 : index
    %c0_1 = arith.constant 0 : index
    %0 = vector.load %arg0[%c0, %c0_0, %c0_1] : memref<1x32x32xf32, #tpu.memory_space<vmem>>, vector<1x32x32xf32>
    %cst = arith.constant dense<0.000000e+00> : vector<32x32xf32>
    %1 = vector.multi_reduction <add>, %0, %cst [0] : vector<1x32x32xf32> to vector<32x32xf32>
    %c0_2 = arith.constant 0 : index
    %c0_3 = arith.constant 0 : index
    %c0_4 = arith.constant 0 : index
    %2 = vector.load %arg1[%c0_2, %c0_3, %c0_4] : memref<1x1x1xf32, #tpu.memory_space<vmem>>, vector<1x1x1xf32>
    %3 = vector.shape_cast %2 : vector<1x1x1xf32> to vector<1x1x1x1xf32>
    %cst_5 = arith.constant dense<0.000000e+00> : vector<1xf32>
    %4 = vector.multi_reduction <add>, %3, %cst_5 [1, 2, 3] : vector<1x1x1x1xf32> to vector<1xf32>
    %5 = vector.shape_cast %4 : vector<1xf32> to vector<1x1x1x1xf32>
    %6 = vector.extract %5[0, 0, 0, 0] : f32 from vector<1x1x1x1xf32>
    %cst_6 = arith.constant 6.400000e+01 : f32
    %7 = arith.divf %cst_6, %6 : f32
    %8 = vector.broadcast %7 : f32 to vector<32x32xf32>
    %9 = arith.mulf %1, %8 : vector<32x32xf32>
    %cst_7 = arith.constant 1.000000e+00 : f32
    %10 = vector.broadcast %cst_7 : f32 to vector<1x32xf32>
    %cst_8 = arith.constant dense<0.000000e+00> : vector<1x32xf32>
    %11 = tpu.matmul %10, %9, %cst_8 {dimension_numbers = #tpu.dot_dimension_numbers<[1], [1], [0], [0], [0, 0, 1, 0], [], []>} : vector<1x32xf32>, vector<32x32xf32>, vector<1x32xf32> -> vector<1x32xf32>
    %12 = tpu.reciprocal %11 : vector<1x32xf32> -> vector<1x32xf32>
    %13 = vector.broadcast %12 : vector<1x32xf32> to vector<32x32xf32>
    %14 = arith.mulf %9, %13 : vector<32x32xf32>
    %15 = tpu.iota {dimensions = array<i32: 0>} : vector<32x32xi32>
    %16 = tpu.iota {dimensions = array<i32: 1>} : vector<32x32xi32>
    %17 = arith.cmpi eq, %15, %16 : vector<32x32xi32>
    %cst_9 = arith.constant 0.000000e+00 : f32
    %18 = vector.broadcast %cst_9 : f32 to vector<32x32xf32>
    %19 = arith.select %17, %18, %14 : vector<32x32xi1>, vector<32x32xf32>
    %20 = vector.shape_cast %19 : vector<32x32xf32> to vector<1x32x32xf32>
    %cst_10 = arith.constant dense<0.000000e+00> : vector<1xf32>
    %21 = vector.multi_reduction <add>, %20, %cst_10 [1, 2] : vector<1x32x32xf32> to vector<1xf32>
    %22 = vector.shape_cast %21 : vector<1xf32> to vector<1x1x1xf32>
    %23 = vector.extract %22[0, 0, 0] : f32 from vector<1x1x1xf32>
    %cst_11 = arith.constant 3.125000e-02 : f32
    %24 = arith.mulf %cst_11, %23 : f32
    %25 = vector.broadcast %24 : f32 to vector<1x1xf32>
    %c0_12 = arith.constant 0 : index
    %c0_13 = arith.constant 0 : index
    %26 = vector.load %arg2[%c0_12, %c0_13] : memref<1x1xf32, #tpu.memory_space<vmem>>, vector<1x1xf32>
    tpu.vector_store %arg2[%c0_12, %c0_13], %25 {strides = array<i32>} : memref<1x1xf32, #tpu.memory_space<vmem>>, vector<1x1xf32>,
    return
  }
}

module attributes {stable_mosaic.version = 11 : i64} {
  func.func @_mcc_partial_kernel(%arg0: i32, %arg1: i32, %arg2: memref<64x32xf32, #tpu.memory_space<vmem>>, %arg3: memref<1x32x32xf32, #tpu.memory_space<vmem>>, %arg4: memref<1x1x1xf32, #tpu.memory_space<vmem>>) attributes {dimension_semantics = [#tpu.dimension_semantics<parallel>, #tpu.dimension_semantics<arbitrary>], iteration_bounds = array<i64: 1, 1>, scalar_prefetch = 0 : i64, scratch_operands = 0 : i64, tpu.core_type = #tpu.core_type<tc>, window_params = [{transform_indices = @transform_0, window_bounds = array<i64: 64, 32>}, {transform_indices = @transform_1, window_bounds = array<i64: 1, 32, 32>}, {transform_indices = @transform_2, window_bounds = array<i64: 1, 1, 1>}]} {
    %c0_i32 = arith.constant 0 : i32
    %0 = arith.cmpi eq, %arg1, %c0_i32 : i32
    %1 = arith.extui %0 : i1 to i32
    %c0_i32_0 = arith.constant 0 : i32
    %2 = arith.cmpi ne, %1, %c0_i32_0 : i32
    scf.if %2 {
      %cst_23 = arith.constant 0.000000e+00 : f32
      %44 = vector.broadcast %cst_23 : f32 to vector<1x32x32xf32>
      %c0_24 = arith.constant 0 : index
      %c0_25 = arith.constant 0 : index
      %c0_26 = arith.constant 0 : index
      %45 = vector.load %arg3[%c0_24, %c0_25, %c0_26] : memref<1x32x32xf32, #tpu.memory_space<vmem>>, vector<1x32x32xf32>
      tpu.vector_store %arg3[%c0_24, %c0_25, %c0_26], %44 {strides = array<i32>} : memref<1x32x32xf32, #tpu.memory_space<vmem>>, vector<1x32x32xf32>,
      %cst_27 = arith.constant 0.000000e+00 : f32
      %46 = vector.broadcast %cst_27 : f32 to vector<1x1x1xf32>
      %c0_28 = arith.constant 0 : index
      %c0_29 = arith.constant 0 : index
      %c0_30 = arith.constant 0 : index
      %47 = vector.load %arg4[%c0_28, %c0_29, %c0_30] : memref<1x1x1xf32, #tpu.memory_space<vmem>>, vector<1x1x1xf32>
      tpu.vector_store %arg4[%c0_28, %c0_29, %c0_30], %46 {strides = array<i32>} : memref<1x1x1xf32, #tpu.memory_space<vmem>>, vector<1x1x1xf32>,
    } else {
    }
    %c0 = arith.constant 0 : index
    %c0_1 = arith.constant 0 : index
    %3 = vector.load %arg2[%c0, %c0_1] : memref<64x32xf32, #tpu.memory_space<vmem>>, vector<64x32xf32>
    %cst = arith.constant 4.000000e-01 : f32
    %4 = vector.broadcast %cst : f32 to vector<64x32xf32>
    %5 = arith.mulf %3, %4 : vector<64x32xf32>
    %cst_2 = arith.constant dense<0xFF800000> : vector<64xf32>
    %6 = vector.multi_reduction <maximumf>, %5, %cst_2 [1] : vector<64x32xf32> to vector<64xf32>
    %7 = vector.shape_cast %6 : vector<64xf32> to vector<64x1xf32>
    %8 = vector.broadcast %7 : vector<64x1xf32> to vector<64x32xf32>
    %9 = arith.subf %5, %8 : vector<64x32xf32>
    %10 = math.exp %9 : vector<64x32xf32>
    %cst_3 = arith.constant dense<0.000000e+00> : vector<64xf32>
    %11 = vector.multi_reduction <add>, %10, %cst_3 [1] : vector<64x32xf32> to vector<64xf32>
    %12 = vector.shape_cast %11 : vector<64xf32> to vector<64x1xf32>
    %13 = tpu.reciprocal %12 : vector<64x1xf32> -> vector<64x1xf32>
    %14 = vector.broadcast %13 : vector<64x1xf32> to vector<64x32xf32>
    %15 = arith.mulf %10, %14 : vector<64x32xf32>
    %cst_4 = arith.constant 9.99999974E-6 : f32
    %16 = vector.broadcast %cst_4 : f32 to vector<64x32xf32>
    %17 = arith.addf %15, %16 : vector<64x32xf32>
    %18 = math.log %17 : vector<64x32xf32>
    %19 = arith.mulf %15, %18 : vector<64x32xf32>
    %cst_5 = arith.constant dense<0.000000e+00> : vector<64xf32>
    %20 = vector.multi_reduction <add>, %19, %cst_5 [1] : vector<64x32xf32> to vector<64xf32>
    %21 = vector.shape_cast %20 : vector<64xf32> to vector<64x1xf32>
    %cst_6 = arith.constant 0.000000e+00 : f32
    %22 = vector.broadcast %cst_6 : f32 to vector<64x1xf32>
    %23 = arith.subf %22, %21 : vector<64x1xf32>
    %cst_7 = arith.constant 0.000000e+00 : f32
    %24 = vector.broadcast %cst_7 : f32 to vector<64x1xf32>
    %25 = arith.subf %24, %23 : vector<64x1xf32>
    %26 = math.exp %25 : vector<64x1xf32>
    %cst_8 = arith.constant 1.000000e+00 : f32
    %27 = vector.broadcast %cst_8 : f32 to vector<64x1xf32>
    %28 = arith.addf %27, %26 : vector<64x1xf32>
    %c0_9 = arith.constant 0 : index
    %c0_10 = arith.constant 0 : index
    %c0_11 = arith.constant 0 : index
    %29 = vector.load %arg4[%c0_9, %c0_10, %c0_11] : memref<1x1x1xf32, #tpu.memory_space<vmem>>, vector<1x1x1xf32>
    %30 = vector.shape_cast %28 : vector<64x1xf32> to vector<1x64x1xf32>
    %cst_12 = arith.constant dense<0.000000e+00> : vector<1xf32>
    %31 = vector.multi_reduction <add>, %30, %cst_12 [1, 2] : vector<1x64x1xf32> to vector<1xf32>
    %32 = vector.shape_cast %31 : vector<1xf32> to vector<1x1x1xf32>
    %33 = vector.extract %32[0, 0, 0] : f32 from vector<1x1x1xf32>
    %34 = vector.broadcast %33 : f32 to vector<1x1x1xf32>
    %35 = arith.addf %29, %34 : vector<1x1x1xf32>
    %c0_13 = arith.constant 0 : index
    %c0_14 = arith.constant 0 : index
    %c0_15 = arith.constant 0 : index
    %36 = vector.load %arg4[%c0_13, %c0_14, %c0_15] : memref<1x1x1xf32, #tpu.memory_space<vmem>>, vector<1x1x1xf32>
    tpu.vector_store %arg4[%c0_13, %c0_14, %c0_15], %35 {strides = array<i32>} : memref<1x1x1xf32, #tpu.memory_space<vmem>>, vector<1x1x1xf32>,
    %37 = vector.broadcast %28 : vector<64x1xf32> to vector<64x32xf32>
    %38 = arith.mulf %15, %37 : vector<64x32xf32>
    %c0_16 = arith.constant 0 : index
    %c0_17 = arith.constant 0 : index
    %c0_18 = arith.constant 0 : index
    %39 = vector.load %arg3[%c0_16, %c0_17, %c0_18] : memref<1x32x32xf32, #tpu.memory_space<vmem>>, vector<1x32x32xf32>
    %cst_19 = arith.constant dense<0.000000e+00> : vector<32x32xf32>
    %40 = tpu.matmul %38, %15, %cst_19 {dimension_numbers = #tpu.dot_dimension_numbers<[0], [0], [1], [1], [0, 1, 1, 1], [], []>} : vector<64x32xf32>, vector<64x32xf32>, vector<32x32xf32> -> vector<32x32xf32>
    %41 = vector.shape_cast %40 : vector<32x32xf32> to vector<1x32x32xf32>
    %42 = arith.addf %39, %41 : vector<1x32x32xf32>
    %c0_20 = arith.constant 0 : index
    %c0_21 = arith.constant 0 : index
    %c0_22 = arith.constant 0 : index
    %43 = vector.load %arg3[%c0_20, %c0_21, %c0_22] : memref<1x32x32xf32, #tpu.memory_space<vmem>>, vector<1x32x32xf32>
    tpu.vector_store %arg3[%c0_20, %c0_21, %c0_22], %42 {strides = array<i32>} : memref<1x32x32xf32, #tpu.memory_space<vmem>>, vector<1x32x32xf32>,
    return
  }
  func.func @transform_0(%arg0: i32, %arg1: i32) -> (i32, i32) {
    %c1_i32 = arith.constant 1 : i32
    %0 = arith.muli %arg0, %c1_i32 : i32
    %1 = arith.addi %0, %arg1 : i32
    %c0_i32 = arith.constant 0 : i32
    %c0_i32_0 = arith.constant 0 : i32
    return %1, %c0_i32 : i32, i32
  }
  func.func @transform_1(%arg0: i32, %arg1: i32) -> (i32, i32, i32) {
    %c0_i32 = arith.constant 0 : i32
    %c0_i32_0 = arith.constant 0 : i32
    %c0_i32_1 = arith.constant 0 : i32
    return %arg0, %c0_i32, %c0_i32_0 : i32, i32, i32
  }
  func.func @transform_2(%arg0: i32, %arg1: i32) -> (i32, i32, i32) {
    %c0_i32 = arith.constant 0 : i32
    %c0_i32_0 = arith.constant 0 : i32
    %c0_i32_1 = arith.constant 0 : i32
    return %arg0, %c0_i32, %c0_i32_0 : i32, i32, i32
  }
}

</mosaic_0001>

<llo_original>
// kernel: mcc_loss.3
$region0: #{mcc_loss.3}
  #allocation0 [shape = 'u32[]', space=smem, size = 0x4, offset = 0x4, fixed_abs, tag = 'smem constant byte address 0x4 - core index']
  #allocation1 [shape = 'u32[144,128]{1,0:T(1,128)}', space=vmem, size = 0x12000, scoped, tag = 'internal scratch']
  #allocation2 [shape = 'f32[1,1,1]{2,1,0:T(1,128)S(1)}', space=vmem, size = 0x200, scoped, tag = 'scoped memory for mcc_loss.3']
  %s0 = inlined_call_operand.vmem [shape: f32[1,32,32], index: 0, kind: input, shape index: {}]
  %s1 = inlined_call_operand.<no memory space> [shape: f32[1,1,1], index: 1, kind: input, shape index: {}]
  %s2 = inlined_call_operand.hbm [shape: f32[1,1], index: 2, kind: output, shape index: {}]
  %s3 = sld [smem:[#allocation0]]
  $region18: #{mcc_loss.3} parent=0
    _
  %s5 = ssub.s32 1, %s3
  %s6 = scalar_select 0, %s5, %s3
  %v7 = vstv %s1
  %8 = vst [vmem:[#allocation2] sm:$0x1] %v7
  $region1: #{mcc_loss.3} parent=0
    #allocation3 [shape = 'u8[512]{0}', space=vmem, size = 0x400, scoped, tag = 'output window, operand 0, single buffered']
    #allocation4 [shape = 's32[1]{0}', space=sflag, size = 0x4, scoped, tag = 'scoped memory for mcc_loss.3']
    %9 = vsyncpa [#allocation4], 0
    // Predicated region
    $region2: #{mcc_loss.3} parent=1 // pred_check
      _
    $region3: #{mcc_loss.3} parent=1 // pred_check_branch
      %11 = sbr.rel (0) target = $region5
    $region4: #{mcc_loss.3} parent=1 // pred_region
      _
    $region5: #{mcc_loss.3} parent=1 // pred_fallthru
      _
    // Predicated region
    $region6: #{mcc_loss.3} parent=1 // pred_check
      _
    $region7: #{mcc_loss.3} parent=1 // pred_check_branch
      %13 = sbr.rel (0) target = $region9
    $region8: #{mcc_loss.3} parent=1 // pred_region
      _
    $region9: #{mcc_loss.3} parent=1 // pred_fallthru
      _
    %v14 = vld [vmem:[%s0] sm:$0xff]
    %v15 = vld [vmem:[%s0 + $0x8] sm:$0xff]
    %v16 = vld [vmem:[%s0 + $0x10] sm:$0xff]
    %v17 = vld [vmem:[%s0 + $0x18] sm:$0xff]
    %v18 = vadd.f32 %v14, 0.0
    %v19 = vadd.f32 %v15, 0.0
    %v20 = vadd.f32 %v16, 0.0
    %v21 = vadd.f32 %v17, 0.0
    %v22 = vld [vmem:[#allocation2] sm:$0x1]
    %v23 = vadd.f32 %v22, 0.0
    %s24 = vtos %v23
    %v25 = vstv %s24
    %v26 = vrcp.pop %v25
    %s27 = vtos %v26
    %s28 = smul.f32 64.0, %s27
    %v29 = vstv %s28
    %v30 = vmul.f32 %v18, %v29
    %v31 = vmul.f32 %v19, %v29
    %v32 = vmul.f32 %v20, %v29
    %v33 = vmul.f32 %v21, %v29
    %vm34 = vcmask 261120
    %v36 = vsel %vm34, 1.0, 0
    %v39 = vsel %vm34, %v30, 0
    %v42 = vsel %vm34, %v31, 0
    %v45 = vsel %vm34, %v32, 0
    %v48 = vsel %vm34, %v33, 0
    %50 = vmatprep.subr.mxu0 0.0
    %51 = vmatpush1.xpose.msra.mxu0 %v39
    %52 = vmatprep.subr.mxu0 0.0
    %53 = vmatpush1.xpose.msra.mxu0 %v42
    %54 = vmatprep.subr.mxu0 0.0
    %55 = vmatpush1.xpose.msra.mxu0 %v45
    %56 = vmatprep.subr.mxu0 0.0
    %57 = vmatpush1.xpose.msra.mxu0 %v48
    %58 = vmatprep.subr.mxu0 0.0
    %59 = vmatpush1.xpose.msra.mxu0 0.0
    %60 = vmatprep.subr.mxu0 0.0
    %61 = vmatpush1.xpose.msra.mxu0 0.0
    %62 = vmatprep.subr.mxu0 0.0
    %63 = vmatpush1.xpose.msra.mxu0 0.0
    %64 = vmatprep.subr.mxu0 0.0
    %65 = vmatpush1.xpose.msra.mxu0 0.0
    %66 = vmatprep.subr.mxu0 0.0
    %67 = vmatpush1.xpose.msra.mxu0 0.0
    %68 = vmatprep.subr.mxu0 0.0
    %69 = vmatpush1.xpose.msra.mxu0 0.0
    %70 = vmatprep.subr.mxu0 0.0
    %71 = vmatpush1.xpose.msra.mxu0 0.0
    %72 = vmatprep.subr.mxu0 0.0
    %73 = vmatpush1.xpose.msra.mxu0 0.0
    %74 = vmatprep.subr.mxu0 0.0
    %75 = vmatpush1.xpose.msra.mxu0 0.0
    %76 = vmatprep.subr.mxu0 0.0
    %77 = vmatpush1.xpose.msra.mxu0 0.0
    %78 = vmatprep.subr.mxu0 0.0
    %79 = vmatpush1.xpose.msra.mxu0 0.0
    %80 = vmatprep.subr.mxu0 0.0
    %81 = vmatpush1.xpose.msra.mxu0 0.0
    %82 = vmatprep.subr.mxu0 0.0
    %83 = vmatpush1.xpose.msra.mxu0 0.0
    %84 = vmatprep.subr.mxu0 0.0
    %85 = vmatpush1.xpose.msra.mxu0 0.0
    %86 = vmatprep.subr.mxu0 0.0
    %87 = vmatpush1.xpose.msra.mxu0 0.0
    %88 = vmatprep.subr.mxu0 0.0
    %89 = vmatpush1.xpose.msra.mxu0 0.0
    %90 = vmatprep.subr.mxu0 0.0
    %91 = vmatpush1.xpose.msra.mxu0 0.0
    %92 = vmatprep.subr.mxu0 0.0
    %93 = vmatpush1.xpose.msra.mxu0 0.0
    %94 = vmatprep.subr.mxu0 0.0
    %95 = vmatpush1.xpose.msra.mxu0 0.0
    %96 = vmatprep.subr.mxu0 0.0
    %97 = vmatpush1.xpose.msra.mxu0 0.0
    %98 = vmatprep.subr.mxu0 0.0
    %99 = vmatpush1.xpose.msra.mxu0 0.0
    %100 = vmatprep.subr.mxu0 0.0
    %101 = vmatpush1.xpose.msra.mxu0 0.0
    %102 = vmatprep.subr.mxu0 0.0
    %103 = vmatpush1.xpose.msra.mxu0 0.0
    %104 = vmatprep.subr.mxu0 0.0
    %105 = vmatpush1.xpose.msra.mxu0 0.0
    %106 = vmatprep.subr.mxu0 0.0
    %107 = vmatpush1.xpose.msra.mxu0 0.0
    %108 = vmatprep.subr.mxu0 0.0
    %109 = vmatpush1.xpose.msra.mxu0 0.0
    %110 = vmatprep.subr.mxu0 0.0
    %111 = vmatpush1.xpose.msra.mxu0 0.0
    %112 = vmatprep.subr.mxu0 0.0
    %113 = vmatpush1.xpose.msra.mxu0 0.0
    %114 = vmatprep.mubr.f32.mxu0 0.0
    %115 = vmatmul.mubr.f32.gmra.mrb[0].mxu0 %v36
    %v116 = vpop.f32.mrb[0].mxu0
    %v117 = vadd.f32 0.0, %v116
    %v118 = vpop.f32.mrb[0].mxu0
    %119 = vdwg.mxu0
    %v120 = vrcp.pop %v117
    %v121 = vlaneseq
    %v122 = vshrl.u32 %v121, 7
    %v123 = vsub.s32 0, %v122
    %v124 = vrot.slane %v120, %v123
    %v125 = vmul.f32 %v30, %v124
    %v126 = vmul.f32 %v31, %v124
    %v127 = vmul.f32 %v32, %v124
    %v128 = vmul.f32 %v33, %v124
    %v129 = vlaneseq
    %v130 = vshrl.u32 %v129, 7
    %v131 = vadd.s32 %v130, 8
    %v132 = vadd.s32 %v130, 16
    %v133 = vadd.s32 %v130, 24
    %v134 = vlaneseq
    %v135 = vand.u32 %v134, 127
    %vm136 = vcmp.eq.s32.totalorder %v130, %v135
    %vm137 = vcmp.eq.s32.totalorder %v131, %v135
    %vm138 = vcmp.eq.s32.totalorder %v132, %v135
    %vm139 = vcmp.eq.s32.totalorder %v133, %v135
    %v140 = vsel %vm136, 0.0, %v125
    %v141 = vsel %vm137, 0.0, %v126
    %v142 = vsel %vm138, 0.0, %v127
    %v143 = vsel %vm139, 0.0, %v128
    %v144 = vsel %vm34, %v140, 0.0
    %v145 = vsel %vm34, %v141, 0.0
    %v146 = vadd.f32 %v144, %v145
    %v147 = vsel %vm34, %v142, 0.0
    %v148 = vadd.f32 %v146, %v147
    %v149 = vsel %vm34, %v143, 0.0
    %v150 = vadd.f32 %v148, %v149
    %151 = vadd.xlane.f32.xlu0 %v150
    %v152 = vpop.xlane.xlu0 %151
    %v153 = vrot.slane %v152, 4
    %v154 = vadd.f32 %v152, %v153
    %v155 = vrot.slane %v154, 2
    %v156 = vadd.f32 %v154, %v155
    %v157 = vrot.slane %v156, 1
    %v158 = vadd.f32 %v156, %v157
    %s159 = vtos %v158
    %s160 = smul.f32 %s159, 0.03125
    %v161 = vstv %s160
    %vm162 = vcmask 0
    %163 = vst.msk [vmem:[#allocation3] sm:$0x1] %vm162, %v161
    // Predicated region
    $region10: #{mcc_loss.3} parent=1 // pred_check
      _
    $region11: #{mcc_loss.3} parent=1 // pred_check_branch
      %165 = sbr.rel (0) target = $region13
    $region12: #{mcc_loss.3} parent=1 // pred_region
      %s167 = ssub.s32 16, 16
      %168 = vsyncadd [#allocation4], %s167
      %s170 = sshll.u32 [#allocation3], 4
      %s171 = int_to_ptr.vmem [resolvable:$true] %s170
      %173 = dma.vmem_to_hbm [thread:$0]  %s171, 16, %s2, [#allocation4]
    $region13: #{mcc_loss.3} parent=1 // pred_fallthru
      _
    // Predicated region
    $region14: #{mcc_loss.3} parent=1 // pred_check
      _
    $region15: #{mcc_loss.3} parent=1 // pred_check_branch
      %175 = sbr.rel (0) target = $region17
    $region16: #{mcc_loss.3} parent=1 // pred_region
      %176 = dma.done [#allocation4], 16
    $region17: #{mcc_loss.3} parent=1 // pred_fallthru
      _
    %177 = vsyncpa [#allocation4], 1

// kernel: mcc_loss.2
$region0: #{mcc_loss.2}
  #allocation0 [shape = 'u32[]', space=smem, size = 0x4, offset = 0x4, fixed_abs, tag = 'smem constant byte address 0x4 - core index']
  #allocation1 [shape = 'u32[144,128]{1,0:T(1,128)}', space=vmem, size = 0x12000, scoped, tag = 'internal scratch']
  %s0 = inlined_call_operand.vmem [shape: f32[64,32], index: 0, kind: input, shape index: {}]
  %s1 = inlined_call_operand.vmem [shape: f32[1,32,32], index: 1, kind: output, shape index: {0}]
  %s2 = inlined_call_operand.hbm [shape: f32[1,1,1], index: 2, kind: output, shape index: {1}]
  %3 = xla_tuple %s1, %s2
  %s4 = sld [smem:[#allocation0]]
  $region26: #{mcc_loss.2} parent=0
    _
  %s6 = ssub.s32 1, %s4
  %s7 = scalar_select 0, %s6, %s4
  $region1: #{mcc_loss.2} parent=0
    #allocation2 [shape = 'u8[512]{0}', space=vmem, size = 0x400, scoped, tag = 'output window, operand 1, single buffered']
    #allocation3 [shape = 's32[1]{0}', space=sflag, size = 0x4, scoped, tag = 'scoped memory for mcc_loss.2']
    %8 = vsyncpa [#allocation3], 0
    // Predicated region
    $region2: #{mcc_loss.2} parent=1 // pred_check
      _
    $region3: #{mcc_loss.2} parent=1 // pred_check_branch
      %10 = sbr.rel (0) target = $region5
    $region4: #{mcc_loss.2} parent=1 // pred_region
      %s11 = sadd.s32 0, 0
      %s12 = smul.u32 8, %s11
      %p13 = scmp.lt.s32.totalorder %s12, 7
      %s14 = scalar_select %p13, %s12, 7
      %s15 = smul.addr %s14, 8
      %s16 = scalar_lea.vmem %s0, %s15
      %s17 = sadd.s32 0, 0
      %s18 = smul.u32 8, %s17
    $region5: #{mcc_loss.2} parent=1 // pred_fallthru
      _
    %s19 = sadd.s32 0, 0
    %s20 = smul.u32 8, %s19
    %p21 = scmp.lt.s32.totalorder %s20, 7
    %s22 = scalar_select %p21, %s20, 7
    %s23 = smul.addr %s22, 8
    %s24 = scalar_lea.vmem %s0, %s23
    %s25 = sadd.s32 0, 0
    %s26 = smul.u32 8, %s25
    %p27 = scmp.lt.s32.totalorder %s26, 7
    %s28 = scalar_select %p27, %s26, 7
    %s29 = smul.addr %s28, 8
    %s30 = scalar_lea.vmem %s0, %s29
    %s31 = sadd.s32 0, 0
    %s32 = smul.u32 8, %s31
    %p33 = scmp.eq.s32.totalorder 0, 0
    // Predicated region
    $region6: #{mcc_loss.2} parent=1 // pred_check
      %p34 = pneg %p33
    $region7: #{mcc_loss.2} parent=1 // pred_check_branch
      %36 = sbr.rel (%p34) target = $region9
    $region8: #{mcc_loss.2} parent=1 // pred_region
      %vm37 = vcmask 261120
      %38 = vst.msk [vmem:[%s1] sm:$0xff] %vm37, 0.0
      %39 = vst.msk [vmem:[%s1 + $0x8] sm:$0xff] %vm37, 0.0
      %40 = vst.msk [vmem:[%s1 + $0x10] sm:$0xff] %vm37, 0.0
      %41 = vst.msk [vmem:[%s1 + $0x18] sm:$0xff] %vm37, 0.0
      %vm42 = vcmask 0
      %43 = vst.msk [vmem:[#allocation2] sm:$0x1] %vm42, 0.0
    $region9: #{mcc_loss.2} parent=1 // pred_fallthru
      _
    %v44 = vld [vmem:[%s30] sm:$0xff]
    %v45 = vld [vmem:[%s30 + $0x8] sm:$0xff]
    %v46 = vld [vmem:[%s30 + $0x10] sm:$0xff]
    %v47 = vld [vmem:[%s30 + $0x18] sm:$0xff]
    %v48 = vld [vmem:[%s30 + $0x20] sm:$0xff]
    %v49 = vld [vmem:[%s30 + $0x28] sm:$0xff]
    %v50 = vld [vmem:[%s30 + $0x30] sm:$0xff]
    %v51 = vld [vmem:[%s30 + $0x38] sm:$0xff]
    %v52 = vmul.f32 %v44, 0.4
    %v53 = vmul.f32 %v45, 0.4
    %v54 = vmul.f32 %v46, 0.4
    %v55 = vmul.f32 %v47, 0.4
    %v56 = vmul.f32 %v48, 0.4
    %v57 = vmul.f32 %v49, 0.4
    %v58 = vmul.f32 %v50, 0.4
    %v59 = vmul.f32 %v51, 0.4
    %vm60 = vcmask 261120
    %v61 = vsel %vm60, %v52, -inf
    %62 = vmax.xlane.f32.xlu0 %v61
    %v63 = vpop.xlane.xlu0 %62
    %v64 = vsel %vm60, %v53, -inf
    %65 = vmax.xlane.f32.xlu0 %v64
    %v66 = vpop.xlane.xlu0 %65
    %v67 = vsel %vm60, %v54, -inf
    %68 = vmax.xlane.f32.xlu0 %v67
    %v69 = vpop.xlane.xlu0 %68
    %v70 = vsel %vm60, %v55, -inf
    %71 = vmax.xlane.f32.xlu0 %v70
    %v72 = vpop.xlane.xlu0 %71
    %v73 = vsel %vm60, %v56, -inf
    %74 = vmax.xlane.f32.xlu0 %v73
    %v75 = vpop.xlane.xlu0 %74
    %v76 = vsel %vm60, %v57, -inf
    %77 = vmax.xlane.f32.xlu0 %v76
    %v78 = vpop.xlane.xlu0 %77
    %v79 = vsel %vm60, %v58, -inf
    %80 = vmax.xlane.f32.xlu0 %v79
    %v81 = vpop.xlane.xlu0 %80
    %v82 = vsel %vm60, %v59, -inf
    %83 = vmax.xlane.f32.xlu0 %v82
    %v84 = vpop.xlane.xlu0 %83
    %v85 = vsub.f32 %v52, %v63
    %v86 = vsub.f32 %v53, %v66
    %v87 = vsub.f32 %v54, %v69
    %v88 = vsub.f32 %v55, %v72
    %v89 = vsub.f32 %v56, %v75
    %v90 = vsub.f32 %v57, %v78
    %v91 = vsub.f32 %v58, %v81
    %v92 = vsub.f32 %v59, %v84
    %v93 = vmul.f32 %v85, 1.442695
    %v94 = vpow.pop %v93
    %v95 = vmul.f32 %v86, 1.442695
    %v96 = vpow.pop %v95
    %v97 = vmul.f32 %v87, 1.442695
    %v98 = vpow.pop %v97
    %v99 = vmul.f32 %v88, 1.442695
    %v100 = vpow.pop %v99
    %v101 = vmul.f32 %v89, 1.442695
    %v102 = vpow.pop %v101
    %v103 = vmul.f32 %v90, 1.442695
    %v104 = vpow.pop %v103
    %v105 = vmul.f32 %v91, 1.442695
    %v106 = vpow.pop %v105
    %v107 = vmul.f32 %v92, 1.442695
    %v108 = vpow.pop %v107
    %v109 = vsel %vm60, %v94, 0.0
    %110 = vadd.xlane.f32.xlu0 %v109
    %v111 = vpop.xlane.xlu0 %110
    %v112 = vsel %vm60, %v96, 0.0
    %113 = vadd.xlane.f32.xlu0 %v112
    %v114 = vpop.xlane.xlu0 %113
    %v115 = vsel %vm60, %v98, 0.0
    %116 = vadd.xlane.f32.xlu0 %v115
    %v117 = vpop.xlane.xlu0 %116
    %v118 = vsel %vm60, %v100, 0.0
    %119 = vadd.xlane.f32.xlu0 %v118
    %v120 = vpop.xlane.xlu0 %119
    %v121 = vsel %vm60, %v102, 0.0
    %122 = vadd.xlane.f32.xlu0 %v121
    %v123 = vpop.xlane.xlu0 %122
    %v124 = vsel %vm60, %v104, 0.0
    %125 = vadd.xlane.f32.xlu0 %v124
    %v126 = vpop.xlane.xlu0 %125
    %v127 = vsel %vm60, %v106, 0.0
    %128 = vadd.xlane.f32.xlu0 %v127
    %v129 = vpop.xlane.xlu0 %128
    %v130 = vsel %vm60, %v108, 0.0
    %131 = vadd.xlane.f32.xlu0 %v130
    %v132 = vpop.xlane.xlu0 %131
    %v133 = vrcp.pop %v111
    %v134 = vrcp.pop %v114
    %v135 = vrcp.pop %v117
    %v136 = vrcp.pop %v120
    %v137 = vrcp.pop %v123
    %v138 = vrcp.pop %v126
    %v139 = vrcp.pop %v129
    %v140 = vrcp.pop %v132
    %v141 = vmul.f32 %v94, %v133
    %v142 = vmul.f32 %v96, %v134
    %v143 = vmul.f32 %v98, %v135
    %v144 = vmul.f32 %v100, %v136
    %v145 = vmul.f32 %v102, %v137
    %v146 = vmul.f32 %v104, %v138
    %v147 = vmul.f32 %v106, %v139
    %v148 = vmul.f32 %v108, %v140
    %v149 = vadd.f32 %v141, 1e-05
    %v150 = vadd.f32 %v142, 1e-05
    %v151 = vadd.f32 %v143, 1e-05
    %v152 = vadd.f32 %v144, 1e-05
    %v153 = vadd.f32 %v145, 1e-05
    %v154 = vadd.f32 %v146, 1e-05
    %v155 = vadd.f32 %v147, 1e-05
    %v156 = vadd.f32 %v148, 1e-05
    %v157 = vlog2.pop %v149
    %v158 = vmul.f32 %v157, 0.6931472
    %v159 = vlog2.pop %v150
    %v160 = vmul.f32 %v159, 0.6931472
    %v161 = vlog2.pop %v151
    %v162 = vmul.f32 %v161, 0.6931472
    %v163 = vlog2.pop %v152
    %v164 = vmul.f32 %v163, 0.6931472
    %v165 = vlog2.pop %v153
    %v166 = vmul.f32 %v165, 0.6931472
    %v167 = vlog2.pop %v154
    %v168 = vmul.f32 %v167, 0.6931472
    %v169 = vlog2.pop %v155
    %v170 = vmul.f32 %v169, 0.6931472
    %v171 = vlog2.pop %v156
    %v172 = vmul.f32 %v171, 0.6931472
    %v173 = vmul.f32 %v141, %v158
    %v174 = vmul.f32 %v142, %v160
    %v175 = vmul.f32 %v143, %v162
    %v176 = vmul.f32 %v144, %v164
    %v177 = vmul.f32 %v145, %v166
    %v178 = vmul.f32 %v146, %v168
    %v179 = vmul.f32 %v147, %v170
    %v180 = vmul.f32 %v148, %v172
    %v181 = vsel %vm60, %v173, 0.0
    %182 = vadd.xlane.f32.xlu0 %v181
    %v183 = vpop.xlane.xlu0 %182
    %v184 = vsel %vm60, %v174, 0.0
    %185 = vadd.xlane.f32.xlu0 %v184
    %v186 = vpop.xlane.xlu0 %185
    %v187 = vsel %vm60, %v175, 0.0
    %188 = vadd.xlane.f32.xlu0 %v187
    %v189 = vpop.xlane.xlu0 %188
    %v190 = vsel %vm60, %v176, 0.0
    %191 = vadd.xlane.f32.xlu0 %v190
    %v192 = vpop.xlane.xlu0 %191
    %v193 = vsel %vm60, %v177, 0.0
    %194 = vadd.xlane.f32.xlu0 %v193
    %v195 = vpop.xlane.xlu0 %194
    %v196 = vsel %vm60, %v178, 0.0
    %197 = vadd.xlane.f32.xlu0 %v196
    %v198 = vpop.xlane.xlu0 %197
    %v199 = vsel %vm60, %v179, 0.0
    %200 = vadd.xlane.f32.xlu0 %v199
    %v201 = vpop.xlane.xlu0 %200
    %v202 = vsel %vm60, %v180, 0.0
    %203 = vadd.xlane.f32.xlu0 %v202
    %v204 = vpop.xlane.xlu0 %203
    %v205 = vsub.f32 0.0, %v183
    %v206 = vsub.f32 0.0, %v186
    %v207 = vsub.f32 0.0, %v189
    %v208 = vsub.f32 0.0, %v192
    %v209 = vsub.f32 0.0, %v195
    %v210 = vsub.f32 0.0, %v198
    %v211 = vsub.f32 0.0, %v201
    %v212 = vsub.f32 0.0, %v204
    %v213 = vsub.f32 0.0, %v205
    %v214 = vsub.f32 0.0, %v206
    %v215 = vsub.f32 0.0, %v207
    %v216 = vsub.f32 0.0, %v208
    %v217 = vsub.f32 0.0, %v209
    %v218 = vsub.f32 0.0, %v210
    %v219 = vsub.f32 0.0, %v211
    %v220 = vsub.f32 0.0, %v212
    %v221 = vmul.f32 %v213, 1.442695
    %v222 = vpow.pop %v221
    %v223 = vmul.f32 %v214, 1.442695
    %v224 = vpow.pop %v223
    %v225 = vmul.f32 %v215, 1.442695
    %v226 = vpow.pop %v225
    %v227 = vmul.f32 %v216, 1.442695
    %v228 = vpow.pop %v227
    %v229 = vmul.f32 %v217, 1.442695
    %v230 = vpow.pop %v229
    %v231 = vmul.f32 %v218, 1.442695
    %v232 = vpow.pop %v231
    %v233 = vmul.f32 %v219, 1.442695
    %v234 = vpow.pop %v233
    %v235 = vmul.f32 %v220, 1.442695
    %v236 = vpow.pop %v235
    %v237 = vadd.f32 %v222, 1.0
    %v238 = vadd.f32 %v224, 1.0
    %v239 = vadd.f32 %v226, 1.0
    %v240 = vadd.f32 %v228, 1.0
    %v241 = vadd.f32 %v230, 1.0
    %v242 = vadd.f32 %v232, 1.0
    %v243 = vadd.f32 %v234, 1.0
    %v244 = vadd.f32 %v236, 1.0
    %v245 = vld [vmem:[#allocation2] sm:$0x1]
    %vm246 = vcmask 7168
    %v247 = vsel %vm246, %v237, 0.0
    %v248 = vsel %vm246, %v238, 0.0
    %v249 = vadd.f32 %v247, %v248
    %v250 = vsel %vm246, %v239, 0.0
    %v251 = vadd.f32 %v249, %v250
    %v252 = vsel %vm246, %v240, 0.0
    %v253 = vadd.f32 %v251, %v252
    %v254 = vsel %vm246, %v241, 0.0
    %v255 = vadd.f32 %v253, %v254
    %v256 = vsel %vm246, %v242, 0.0
    %v257 = vadd.f32 %v255, %v256
    %v258 = vsel %vm246, %v243, 0.0
    %v259 = vadd.f32 %v257, %v258
    %v260 = vsel %vm246, %v244, 0.0
    %v261 = vadd.f32 %v259, %v260
    %262 = vadd.xlane.f32.xlu0 %v261
    %v263 = vpop.xlane.xlu0 %262
    %v264 = vrot.slane %v263, 4
    %v265 = vadd.f32 %v263, %v264
    %v266 = vrot.slane %v265, 2
    %v267 = vadd.f32 %v265, %v266
    %v268 = vrot.slane %v267, 1
    %v269 = vadd.f32 %v267, %v268
    %s270 = vtos %v269
    %v271 = vstv %s270
    %v272 = vadd.f32 %v245, %v271
    %vm273 = vcmask 0
    %274 = vst.msk [vmem:[#allocation2] sm:$0x1] %vm273, %v272
    %v275 = vmul.f32 %v141, %v237
    %v276 = vmul.f32 %v142, %v238
    %v277 = vmul.f32 %v143, %v239
    %v278 = vmul.f32 %v144, %v240
    %v279 = vmul.f32 %v145, %v241
    %v280 = vmul.f32 %v146, %v242
    %v281 = vmul.f32 %v147, %v243
    %v282 = vmul.f32 %v148, %v244
    %v283 = vld [vmem:[%s1] sm:$0xff]
    %v284 = vld [vmem:[%s1 + $0x8] sm:$0xff]
    %v285 = vld [vmem:[%s1 + $0x10] sm:$0xff]
    %v286 = vld [vmem:[%s1 + $0x18] sm:$0xff]
    %287 = vxpose.xlu0.b32.start [1/16] %v275, 128
    %288 = vxpose.xlu0.b32.cont [2/16] %v276, 128
    %289 = vxpose.xlu0.b32.cont [3/16] %v277, 128
    %290 = vxpose.xlu0.b32.cont [4/16] %v278, 128
    %291 = vxpose.xlu0.b32.cont [5/16] %v279, 128
    %292 = vxpose.xlu0.b32.cont [6/16] %v280, 128
    %293 = vxpose.xlu0.b32.cont [7/16] %v281, 128
    %294 = vxpose.xlu0.b32.cont [8/16] %v282, 128
    %295 = vxpose.xlu0.b32.cont [9/16] 0.0, 128
    %296 = vxpose.xlu0.b32.cont [10/16] 0.0, 128
    %297 = vxpose.xlu0.b32.cont [11/16] 0.0, 128
    %298 = vxpose.xlu0.b32.cont [12/16] 0.0, 128
    %299 = vxpose.xlu0.b32.cont [13/16] 0.0, 128
    %300 = vxpose.xlu0.b32.cont [14/16] 0.0, 128
    %301 = vxpose.xlu0.b32.cont [15/16] 0.0, 128
    %302 = vxpose.xlu0.b32.end [16/16] 0.0, 128
    %v303 = vpop.trf.xlu0
    %v304 = vpop.trf.xlu0
    %v305 = vpop.trf.xlu0
    %v306 = vpop.trf.xlu0
    %v307 = vpop.trf.xlu0
    %v308 = vpop.trf.xlu0
    %v309 = vpop.trf.xlu0
    %v310 = vpop.trf.xlu0
    %v311 = vpop.trf.xlu0
    %v312 = vpop.trf.xlu0
    %v313 = vpop.trf.xlu0
    %v314 = vpop.trf.xlu0
    %v315 = vpop.trf.xlu0
    %v316 = vpop.trf.xlu0
    %v317 = vpop.trf.xlu0
    %v318 = vpop.trf.xlu0
    %vm319 = vcmask 523264
    %v321 = vsel %vm319, %v303, 0
    %v324 = vsel %vm319, %v304, 0
    %v327 = vsel %vm319, %v305, 0
    %v330 = vsel %vm319, %v306, 0
    %332 = vmatprep.subr.mxu0 0.0
    %333 = vmatpush1.msra.mxu0 %v141
    %334 = vmatprep.subr.mxu0 0.0
    %335 = vmatpush1.msra.mxu0 %v142
    %336 = vmatprep.subr.mxu0 0.0
    %337 = vmatpush1.msra.mxu0 %v143
    %338 = vmatprep.subr.mxu0 0.0
    %339 = vmatpush1.msra.mxu0 %v144
    %340 = vmatprep.subr.mxu0 0.0
    %341 = vmatpush1.msra.mxu0 %v145
    %342 = vmatprep.subr.mxu0 0.0
    %343 = vmatpush1.msra.mxu0 %v146
    %344 = vmatprep.subr.mxu0 0.0
    %345 = vmatpush1.msra.mxu0 %v147
    %346 = vmatprep.subr.mxu0 0.0
    %347 = vmatpush1.msra.mxu0 %v148
    %348 = vmatprep.subr.mxu0 0.0
    %349 = vmatpush1.msra.mxu0 0.0
    %350 = vmatprep.subr.mxu0 0.0
    %351 = vmatpush1.msra.mxu0 0.0
    %352 = vmatprep.subr.mxu0 0.0
    %353 = vmatpush1.msra.mxu0 0.0
    %354 = vmatprep.subr.mxu0 0.0
    %355 = vmatpush1.msra.mxu0 0.0
    %356 = vmatprep.subr.mxu0 0.0
    %357 = vmatpush1.msra.mxu0 0.0
    %358 = vmatprep.subr.mxu0 0.0
    %359 = vmatpush1.msra.mxu0 0.0
    %360 = vmatprep.subr.mxu0 0.0
    %361 = vmatpush1.msra.mxu0 0.0
    %362 = vmatprep.subr.mxu0 0.0
    %363 = vmatpush1.msra.mxu0 0.0
    %364 = vmatprep.subr.mxu0 0.0
    %365 = vmatpush1.msra.mxu0 0.0
    %366 = vmatprep.subr.mxu0 0.0
    %367 = vmatpush1.msra.mxu0 0.0
    %368 = vmatprep.subr.mxu0 0.0
    %369 = vmatpush1.msra.mxu0 0.0
    %370 = vmatprep.subr.mxu0 0.0
    %371 = vmatpush1.msra.mxu0 0.0
    %372 = vmatprep.subr.mxu0 0.0
    %373 = vmatpush1.msra.mxu0 0.0
    %374 = vmatprep.subr.mxu0 0.0
    %375 = vmatpush1.msra.mxu0 0.0
    %376 = vmatprep.subr.mxu0 0.0
    %377 = vmatpush1.msra.mxu0 0.0
    %378 = vmatprep.subr.mxu0 0.0
    %379 = vmatpush1.msra.mxu0 0.0
    %380 = vmatprep.subr.mxu0 0.0
    %381 = vmatpush1.msra.mxu0 0.0
    %382 = vmatprep.subr.mxu0 0.0
    %383 = vmatpush1.msra.mxu0 0.0
    %384 = vmatprep.subr.mxu0 0.0
    %385 = vmatpush1.msra.mxu0 0.0
    %386 = vmatprep.subr.mxu0 0.0
    %387 = vmatpush1.msra.mxu0 0.0
    %388 = vmatprep.subr.mxu0 0.0
    %389 = vmatpush1.msra.mxu0 0.0
    %390 = vmatprep.subr.mxu0 0.0
    %391 = vmatpush1.msra.mxu0 0.0
    %392 = vmatprep.subr.mxu0 0.0
    %393 = vmatpush1.msra.mxu0 0.0
    %394 = vmatprep.subr.mxu0 0.0
    %395 = vmatpush1.msra.mxu0 0.0
    %396 = vmatprep.mubr.f32.mxu0 0.0
    %397 = vmatmul.mubr.f32.gmra.mrb[0].mxu0 %v321
    %v398 = vpop.f32.mrb[0].mxu0
    %v399 = vadd.f32 0.0, %v398
    %v400 = vpop.f32.mrb[0].mxu0
    %401 = vmatprep.mubr.f32.mxu0 0.0
    %402 = vmatmul.mubr.f32.gmra.mrb[0].mxu0 %v324
    %v403 = vpop.f32.mrb[0].mxu0
    %v404 = vadd.f32 0.0, %v403
    %v405 = vpop.f32.mrb[0].mxu0
    %406 = vmatprep.mubr.f32.mxu0 0.0
    %407 = vmatmul.mubr.f32.gmra.mrb[0].mxu0 %v327
    %v408 = vpop.f32.mrb[0].mxu0
    %v409 = vadd.f32 0.0, %v408
    %v410 = vpop.f32.mrb[0].mxu0
    %411 = vmatprep.mubr.f32.mxu0 0.0
    %412 = vmatmul.mubr.f32.gmra.mrb[0].mxu0 %v330
    %v413 = vpop.f32.mrb[0].mxu0
    %v414 = vadd.f32 0.0, %v413
    %v415 = vpop.f32.mrb[0].mxu0
    %416 = vdwg.mxu0
    %v417 = vadd.f32 %v283, %v399
    %v418 = vadd.f32 %v284, %v404
    %v419 = vadd.f32 %v285, %v409
    %v420 = vadd.f32 %v286, %v414
    %421 = vst.msk [vmem:[%s1] sm:$0xff] %vm60, %v417
    %422 = vst.msk [vmem:[%s1 + $0x8] sm:$0xff] %vm60, %v418
    %423 = vst.msk [vmem:[%s1 + $0x10] sm:$0xff] %vm60, %v419
    %424 = vst.msk [vmem:[%s1 + $0x18] sm:$0xff] %vm60, %v420
    // Predicated region
    $region10: #{mcc_loss.2} parent=1 // pred_check
      _
    $region11: #{mcc_loss.2} parent=1 // pred_check_branch
      %426 = sbr.rel (0) target = $region13
    $region12: #{mcc_loss.2} parent=1 // pred_region
      _
    $region13: #{mcc_loss.2} parent=1 // pred_fallthru
      _
    // Predicated region
    $region14: #{mcc_loss.2} parent=1 // pred_check
      _
    $region15: #{mcc_loss.2} parent=1 // pred_check_branch
      %428 = sbr.rel (0) target = $region17
    $region16: #{mcc_loss.2} parent=1 // pred_region
      %s430 = ssub.s32 16, 16
      %431 = vsyncadd [#allocation3], %s430
      %s433 = sshll.u32 [#allocation2], 4
      %s434 = int_to_ptr.vmem [resolvable:$true] %s433
      %436 = dma.vmem_to_hbm [thread:$0]  %s434, 16, %s2, [#allocation3]
    $region17: #{mcc_loss.2} parent=1 // pred_fallthru
      _
    // Predicated region
    $region18: #{mcc_loss.2} parent=1 // pred_check
      _
    $region19: #{mcc_loss.2} parent=1 // pred_check_branch
      %438 = sbr.rel (0) target = $region21
    $region20: #{mcc_loss.2} parent=1 // pred_region
      _
    $region21: #{mcc_loss.2} parent=1 // pred_fallthru
      _
    // Predicated region
    $region22: #{mcc_loss.2} parent=1 // pred_check
      _
    $region23: #{mcc_loss.2} parent=1 // pred_check_branch
      %440 = sbr.rel (0) target = $region25
    $region24: #{mcc_loss.2} parent=1 // pred_region
      %441 = dma.done [#allocation3], 16
    $region25: #{mcc_loss.2} parent=1 // pred_fallthru
      _
    %442 = vsyncpa [#allocation3], 1

</llo_original>
